<compile_context>
chip_gen: v7x
topology: tpu7x:2x2x1
jax: 0.10.0
libtpu: 0.0.40
codegen_flags: <defaults>
</compile_context>

<pallas_src>
import functools
import math

import jax
import jax.numpy as jnp
from jax.experimental import pallas as pl
from jax.experimental.pallas import tpu as pltpu


_BN_EPS = 1e-5
_TM_CANDIDATES = (256, 128, 64, 32, 16)   # M tiles: multiples of 16 (bf16 sublane pack)


def _round_up(x, m):
    return ((x + m - 1) // m) * m


# ---------------------------------------------------------------------------
# Generation-aware VMEM budgets
# ---------------------------------------------------------------------------
@functools.lru_cache(maxsize=1)
def _vmem_capacity_bytes():
    try:
        info = pltpu.get_tpu_info()
        cap = getattr(info, "vmem_capacity_bytes", None)
        if cap:
            return int(cap)
    except Exception:
        pass
    return 64 * 1024 * 1024          # conservative fallback (v7x per-TC VMEM)


def _vmem_budget():
    return int(_vmem_capacity_bytes() * 0.70)


def _vmem_limit():
    return int(_vmem_capacity_bytes() * 0.85)


# ---------------------------------------------------------------------------
# Pallas kernels: fused matmul + bias (+ residual) (+ ReLU)
# ---------------------------------------------------------------------------
def _linear_kernel(a_ref, w_ref, b_ref, o_ref, *, relu):
    acc = jnp.dot(a_ref[...], w_ref[...], preferred_element_type=jnp.float32)
    acc = acc + b_ref[...]                         # f32 epilogue
    if relu:
        acc = jnp.maximum(acc, 0.0)
    o_ref[...] = acc.astype(o_ref.dtype)


def _linear_res_kernel(a_ref, w_ref, b_ref, r_ref, o_ref, *, relu):
    acc = jnp.dot(a_ref[...], w_ref[...], preferred_element_type=jnp.float32)
    acc = acc + b_ref[...] + r_ref[...].astype(jnp.float32)   # fused residual add
    if relu:
        acc = jnp.maximum(acc, 0.0)
    o_ref[...] = acc.astype(o_ref.dtype)


# ---------------------------------------------------------------------------
# Tiling selection (M tile first, lane-dense 256-wide N tiles)
# ---------------------------------------------------------------------------
def _pick_tn(Np):
    # Prefer 256 (MXU width on v6e/v7x); 128 only when N can't be split at 256.
    for tn in (256, 128):
        if Np % tn == 0:
            return tn
    return 128


def _vmem_estimate(tm, Kp, tn, m_tiles, n_tiles, has_res, out_bytes):
    act_bufs = 1 if m_tiles == 1 else 2           # invariant -> single buffer
    w_bufs = 1 if n_tiles == 1 else 2
    v = act_bufs * tm * Kp * 2                    # bf16 activation block
    v += w_bufs * (Kp * tn * 2 + 8 * tn * 4)      # bf16 weight + f32 bias
    if has_res:
        v += 2 * tm * tn * 2                      # bf16 residual block
    v += 2 * tm * tn * out_bytes                  # output block
    v += tm * tn * 4                              # f32 accumulate temp
    return v


def _select_tiles(M, Kp, Np, has_res, out_bytes):
    budget = _vmem_budget()
    Mp_min = _round_up(M, 16)
    tn = _pick_tn(Np)
    tm = next(t for t in _TM_CANDIDATES if t <= Mp_min)
    while True:
        m_tiles = -(-Mp_min // tm)
        n_tiles = Np // tn
        if _vmem_estimate(tm, Kp, tn, m_tiles, n_tiles, has_res, out_bytes) <= budget:
            break
        if tm > 16:                               # shrink M tile first (keep MXU-wide tn)
            tm = _TM_CANDIDATES[_TM_CANDIDATES.index(tm) + 1]
        elif tn > 128:
            tn //= 2
        else:
            break
    Mp = _round_up(Mp_min, tm)
    return tm, tn, Mp


def _bspec(shape, index_map, invariant):
    if invariant:
        return pl.BlockSpec(shape, index_map, pipeline_mode=pl.Buffered(1))
    return pl.BlockSpec(shape, index_map)


# ---------------------------------------------------------------------------
# Fused matmul wrapper.  Weights/bias arrive pre-folded / pre-padded (see prepare_*).
# ---------------------------------------------------------------------------
def linear_pallas(x, prep, res=None, relu=False, out_dtype=jnp.bfloat16):
    """y = act(x @ W + b [+ res]).  x:(M,K) any float dtype, res:(M,N) optional."""
    M, K = x.shape
    N = prep['n']
    Kp, Np = prep['w'].shape
    assert K == prep['k'], (K, prep['k'])

    has_res = res is not None
    out_bytes = jnp.dtype(out_dtype).itemsize
    tm, tn, Mp = _select_tiles(M, Kp, Np, has_res, out_bytes)
    m_tiles, n_tiles = Mp // tm, Np // tn

    xp = x.astype(jnp.bfloat16)
    if (Mp, Kp) != (M, K):
        xp = jnp.pad(xp, ((0, Mp - M), (0, Kp - K)))

    in_specs = [
        _bspec((tm, Kp), lambda i, j: (i, 0), invariant=(m_tiles == 1)),   # activation
        _bspec((Kp, tn), lambda i, j: (0, j), invariant=(n_tiles == 1)),   # weights
        _bspec((1, tn), lambda i, j: (0, j), invariant=(n_tiles == 1)),    # bias
    ]
    args = [xp, prep['w'], prep['b']]
    if has_res:
        rp = res.astype(jnp.bfloat16)
        if (Mp, Np) != res.shape:
            rp = jnp.pad(rp, ((0, Mp - res.shape[0]), (0, Np - res.shape[1])))
        in_specs.append(_bspec((tm, tn), lambda i, j: (i, j),
                               invariant=(m_tiles == 1 and n_tiles == 1)))
        args.append(rp)
        kernel = functools.partial(_linear_res_kernel, relu=relu)
    else:
        kernel = functools.partial(_linear_kernel, relu=relu)

    out = pl.pallas_call(
        kernel,
        out_shape=jax.ShapeDtypeStruct((Mp, Np), out_dtype),
        grid_spec=pltpu.PrefetchScalarGridSpec(
            num_scalar_prefetch=0,
            grid=(m_tiles, n_tiles),
            in_specs=in_specs,
            out_specs=pl.BlockSpec((tm, tn), lambda i, j: (i, j)),
        ),
        compiler_params=pltpu.CompilerParams(
            dimension_semantics=("parallel", "parallel"),
            vmem_limit_bytes=_vmem_limit()),
    )(*args)

    if (Mp, Np) != (M, N):
        out = out[:M, :N]
    return out


# ---------------------------------------------------------------------------
# One-time weight preparation: fold BN (f32), transpose, pad, cast to bf16.
# ---------------------------------------------------------------------------
def _fold_bn(conv, bn):
    s = bn['gamma'] * jax.lax.rsqrt(bn['var'] + _BN_EPS)      # fold in f32
    wf = conv['w'] * s[:, None, None, None]
    bf = (conv['b'] - bn['mean']) * s + bn['beta']
    return wf, bf


def _prep_matmul(wmat_f32, bias_f32):
    K, N = wmat_f32.shape
    Kp, Np = _round_up(K, 128), _round_up(N, 128)
    w = jnp.pad(wmat_f32, ((0, Kp - K), (0, Np - N))).astype(jnp.bfloat16)
    b = jnp.pad(bias_f32.astype(jnp.float32), ((0, Np - N),)).reshape(1, Np)
    return {'w': w, 'b': b, 'k': K, 'n': N}


def prepare_conv_bn(conv, bn):
    wf, bf = _fold_bn(conv, bn)
    Cout, Cin, kh, kw = wf.shape
    wmat = jnp.transpose(wf, (2, 3, 1, 0)).reshape(kh * kw * Cin, Cout)
    p = _prep_matmul(wmat, bf)
    p['ksize'] = kh
    p['cin'] = Cin
    return p


def prepare_linear(lin):
    return _prep_matmul(lin['w'].T, lin['b'])


def prepare_params(p):
    q = {'conv1': prepare_conv_bn(p['conv1'], p['bn1'])}
    for name in ('layer1', 'layer2', 'layer3', 'layer4'):
        q[name] = []
        for blk in p[name]:
            qb = {
                'conv1': prepare_conv_bn(blk['conv1'], blk['bn1']),
                'conv2': prepare_conv_bn(blk['conv2'], blk['bn2']),
                'conv3': prepare_conv_bn(blk['conv3'], blk['bn3']),
                'stride': blk['stride'],
            }
            if 'ds_conv' in blk:
                qb['ds'] = prepare_conv_bn(blk['ds_conv'], blk['ds_bn'])
            q[name].append(qb)
    for name in ('fc', 'mtdt_fc1', 'mtdt_fc2', 'comb1', 'comb2', 'comb3'):
        q[name] = prepare_linear(p[name])
    return q


# ---------------------------------------------------------------------------
# Conv layers = (reshape | im2col) + fused Pallas matmul (BN already folded)
# ---------------------------------------------------------------------------
def conv1x1_pallas(x, prep, stride, relu, res=None):
    if stride > 1:
        x = x[:, ::stride, ::stride, :]
    N, H, W, C = x.shape
    y = linear_pallas(x.reshape(N * H * W, C), prep, res=res, relu=relu)
    return y.reshape(N, H, W, prep['n'])


def _im2col(x, k, stride, padding):
    N, H, W, C = x.shape
    Ho = (H + 2 * padding - k) // stride + 1
    Wo = (W + 2 * padding - k) // stride + 1
    xp = jnp.pad(x, ((0, 0), (padding, padding), (padding, padding), (0, 0)))
    cols = []
    for dy in range(k):
        for dx in range(k):
            cols.append(xp[:, dy:dy + stride * Ho:stride,
                           dx:dx + stride * Wo:stride, :])
    patches = jnp.concatenate(cols, axis=-1)      # (N, Ho, Wo, k*k*C) bf16
    return patches.reshape(N * Ho * Wo, k * k * C), Ho, Wo


def conv_kxk_pallas(x, prep, stride, padding, relu):
    # TODO(synk): replace this XLA im2col with in-kernel shifted pl.ds loads.
    patches, Ho, Wo = _im2col(x, prep['ksize'], stride, padding)
    y = linear_pallas(patches, prep, relu=relu)
    return y.reshape(x.shape[0], Ho, Wo, prep['n'])


# ---------------------------------------------------------------------------
# Trivial pooling ops as XLA glue
# ---------------------------------------------------------------------------
def maxpool2d(x, kernel=3, stride=2, padding=1):
    N, H, W, C = x.shape
    Ho = (H + 2 * padding - kernel) // stride + 1
    Wo = (W + 2 * padding - kernel) // stride + 1
    xp = jnp.pad(x, ((0, 0), (padding, padding), (padding, padding), (0, 0)),
                 constant_values=-jnp.inf)
    out = None
    for dy in range(kernel):
        for dx in range(kernel):
            tap = xp[:, dy:dy + stride * Ho:stride, dx:dx + stride * Wo:stride, :]
            out = tap if out is None else jnp.maximum(out, tap)
    return out


def global_avgpool(x):
    return jnp.mean(x.astype(jnp.float32), axis=(1, 2))      # (N, C)


# ---------------------------------------------------------------------------
# Deterministic synthetic parameters (PyTorch layouts)
# ---------------------------------------------------------------------------
class KeyGen:
    def __init__(self, seed):
        self._key = jax.random.PRNGKey(seed)

    def __call__(self):
        self._key, sub = jax.random.split(self._key)
        return sub


def conv_params(kg, cin, cout, k, bias=False):
    std = math.sqrt(2.0 / (cin * k * k))
    w = jax.random.normal(kg(), (cout, cin, k, k), jnp.float32) * std
    b = (0.01 * jax.random.normal(kg(), (cout,), jnp.float32)) if bias \
        else jnp.zeros((cout,), jnp.float32)
    return {'w': w, 'b': b}


def bn_params(kg, c):
    return {
        'gamma': 1.0 + 0.1 * jax.random.normal(kg(), (c,), jnp.float32),
        'beta': 0.01 * jax.random.normal(kg(), (c,), jnp.float32),
        'mean': 0.01 * jax.random.normal(kg(), (c,), jnp.float32),
        'var': jax.random.uniform(kg(), (c,), jnp.float32, 0.5, 1.5),
    }


def linear_params(kg, fin, fout):
    std = math.sqrt(2.0 / fin)
    w = jax.random.normal(kg(), (fout, fin), jnp.float32) * std
    b = 0.01 * jax.random.normal(kg(), (fout,), jnp.float32)
    return {'w': w, 'b': b}


def make_bottleneck_params(kg, inplanes, planes, stride):
    expansion = 4
    p = {
        'conv1': conv_params(kg, inplanes, planes, 1),
        'bn1': bn_params(kg, planes),
        'conv2': conv_params(kg, planes, planes, 3),
        'bn2': bn_params(kg, planes),
        'conv3': conv_params(kg, planes, planes * expansion, 1),
        'bn3': bn_params(kg, planes * expansion),
        'stride': stride,
    }
    if stride != 1 or inplanes != planes * expansion:
        p['ds_conv'] = conv_params(kg, inplanes, planes * expansion, 1)
        p['ds_bn'] = bn_params(kg, planes * expansion)
    return p


def make_layer_params(kg, inplanes, planes, blocks, stride):
    params = [make_bottleneck_params(kg, inplanes, planes, stride)]
    inplanes = planes * 4
    for _ in range(1, blocks):
        params.append(make_bottleneck_params(kg, inplanes, planes, 1))
    return params, inplanes


def make_net_cmr_mtdt_params(seed, num_mtdt, n_classes):
    kg = KeyGen(seed)
    p = {}
    # net_cmr: resnet50 backbone, conv1 replaced by Conv2d(3, 64, 3, padding=1, bias=True)
    p['conv1'] = conv_params(kg, 3, 64, 3, bias=True)
    p['bn1'] = bn_params(kg, 64)
    inplanes = 64
    p['layer1'], inplanes = make_layer_params(kg, inplanes, 64, 3, 1)
    p['layer2'], inplanes = make_layer_params(kg, inplanes, 128, 4, 2)
    p['layer3'], inplanes = make_layer_params(kg, inplanes, 256, 6, 2)
    p['layer4'], inplanes = make_layer_params(kg, inplanes, 512, 3, 2)
    p['fc'] = linear_params(kg, 2048, 2048)          # replaced fc: Linear + ReLU
    # net_1D
    p['mtdt_fc1'] = linear_params(kg, num_mtdt, 64)
    p['mtdt_fc2'] = linear_params(kg, 64, 128)
    # combine head
    p['comb1'] = linear_params(kg, 128 + 2048, 2048)
    p['comb2'] = linear_params(kg, 2048, 1024)
    p['comb3'] = linear_params(kg, 1024, n_classes)
    return p


# ---------------------------------------------------------------------------
# Forward pass (prepared params)
# ---------------------------------------------------------------------------
def bottleneck_forward(x, p):
    stride = p['stride']
    out = conv1x1_pallas(x, p['conv1'], stride=1, relu=True)
    out = conv_kxk_pallas(out, p['conv2'], stride=stride, padding=1, relu=True)
    if 'ds' in p:
        identity = conv1x1_pallas(x, p['ds'], stride=stride, relu=False)
    else:
        identity = x
    N, H, W, C = identity.shape
    # conv3 (1x1) with residual add + ReLU fused into its matmul epilogue.
    out = conv1x1_pallas(out, p['conv3'], stride=1, relu=True,
                         res=identity.reshape(N * H * W, C))
    return out


def net_cmr_forward(x_nchw, p):
    x = jnp.transpose(x_nchw, (0, 2, 3, 1)).astype(jnp.bfloat16)   # NCHW -> NHWC bf16
    x = conv_kxk_pallas(x, p['conv1'], stride=1, padding=1, relu=True)
    x = maxpool2d(x, kernel=3, stride=2, padding=1)
    for layer in ('layer1', 'layer2', 'layer3', 'layer4'):
        for blk in p[layer]:
            x = bottleneck_forward(x, blk)
    feat = global_avgpool(x)                                       # (N, 2048)
    u2 = linear_pallas(feat, p['fc'], relu=True)
    return u2


def net_1d_forward(mtdt, p):
    v = linear_pallas(mtdt, p['mtdt_fc1'], relu=True)
    v = linear_pallas(v, p['mtdt_fc2'], relu=True)
    return v


def net_cmr_mtdt_forward(cmr, mtdt, p):
    u2 = net_cmr_forward(cmr, p)                     # (N, 2048) bf16
    v2 = net_1d_forward(mtdt, p)                     # (N, 128)  bf16
    concat = jnp.concatenate([u2, v2], axis=1)       # (N, 2176)
    h = linear_pallas(concat, p['comb1'], relu=True)
    # Dropout(0.1): identity in inference mode
    h = linear_pallas(h, p['comb2'], relu=True)
    # Dropout(0.1): identity in inference mode
    h = linear_pallas(h, p['comb3'], relu=False, out_dtype=jnp.float32)
    return h


if __name__ == "__main__":
    num_mtdt = 8
    n_classes = 4
    raw_params = make_net_cmr_mtdt_params(0, num_mtdt, n_classes)
    params = prepare_params(raw_params)              # BN fold / pad / bf16 cast: once

    key = jax.random.PRNGKey(0)
    k1, k2 = jax.random.split(key)
    cmr = jax.random.normal(k1, (2, 3, 16, 16), jnp.float32)   # NCHW, like PyTorch
    mtdt = jax.random.normal(k2, (2, num_mtdt), jnp.float32)

    out = net_cmr_mtdt_forward(cmr, mtdt, params)
    out = jax.block_until_ready(out)
    assert out.shape == (2, n_classes), out.shape
    assert bool(jnp.all(jnp.isfinite(out)))
    print("KERNEL_OK")
</pallas_src>

<mosaic_0001>
module attributes {stable_mosaic.version = 11 : i64} {
  func.func @_linear_kernel(%arg0: i32, %arg1: i32, %arg2: memref<256x128xbf16, #tpu.memory_space<vmem>>, %arg3: memref<128x128xbf16, #tpu.memory_space<vmem>>, %arg4: memref<1x128xf32, #tpu.memory_space<vmem>>, %arg5: memref<256x128xbf16, #tpu.memory_space<vmem>>) attributes {dimension_semantics = [#tpu.dimension_semantics<parallel>, #tpu.dimension_semantics<parallel>], iteration_bounds = array<i64: 2, 1>, scalar_prefetch = 0 : i64, scratch_operands = 0 : i64, tpu.core_type = #tpu.core_type<tc>, window_params = [{transform_indices = @transform_0, window_bounds = array<i64: 256, 128>}, {pipeline_mode = #tpu.pipeline_mode<synchronous>, transform_indices = @transform_1, window_bounds = array<i64: 128, 128>}, {pipeline_mode = #tpu.pipeline_mode<synchronous>, transform_indices = @transform_2, window_bounds = array<i64: 1, 128>}, {transform_indices = @transform_3, window_bounds = array<i64: 256, 128>}]} {
    %c0 = arith.constant 0 : index
    %c0_0 = arith.constant 0 : index
    %0 = vector.load %arg2[%c0, %c0_0] : memref<256x128xbf16, #tpu.memory_space<vmem>>, vector<256x128xbf16>
    %c0_1 = arith.constant 0 : index
    %c0_2 = arith.constant 0 : index
    %1 = vector.load %arg3[%c0_1, %c0_2] : memref<128x128xbf16, #tpu.memory_space<vmem>>, vector<128x128xbf16>
    %cst = arith.constant dense<0.000000e+00> : vector<256x128xf32>
    %2 = tpu.matmul %0, %1, %cst {dimension_numbers = #tpu.dot_dimension_numbers<[1], [0], [0], [1], [0, 0, 1, 1], [], []>} : vector<256x128xbf16>, vector<128x128xbf16>, vector<256x128xf32> -> vector<256x128xf32>
    %c0_3 = arith.constant 0 : index
    %c0_4 = arith.constant 0 : index
    %3 = vector.load %arg4[%c0_3, %c0_4] : memref<1x128xf32, #tpu.memory_space<vmem>>, vector<1x128xf32>
    %4 = vector.broadcast %3 : vector<1x128xf32> to vector<256x128xf32>
    %5 = arith.addf %2, %4 : vector<256x128xf32>
    %cst_5 = arith.constant 0.000000e+00 : f32
    %6 = vector.broadcast %cst_5 : f32 to vector<256x128xf32>
    %7 = arith.maximumf %5, %6 : vector<256x128xf32>
    %8 = arith.truncf %7 : vector<256x128xf32> to vector<256x128xbf16>
    %c0_6 = arith.constant 0 : index
    %c0_7 = arith.constant 0 : index
    %9 = vector.load %arg5[%c0_6, %c0_7] : memref<256x128xbf16, #tpu.memory_space<vmem>>, vector<256x128xbf16>
    tpu.vector_store %arg5[%c0_6, %c0_7], %8 {strides = array<i32>} : memref<256x128xbf16, #tpu.memory_space<vmem>>, vector<256x128xbf16>,
    return
  }
  func.func @transform_0(%arg0: i32, %arg1: i32) -> (i32, i32) {
    %c0_i32 = arith.constant 0 : i32
    %c0_i32_0 = arith.constant 0 : i32
    return %arg0, %c0_i32 : i32, i32
  }
  func.func @transform_1(%arg0: i32, %arg1: i32) -> (i32, i32) {
    %c0_i32 = arith.constant 0 : i32
    %c0_i32_0 = arith.constant 0 : i32
    return %c0_i32, %arg1 : i32, i32
  }
  func.func @transform_2(%arg0: i32, %arg1: i32) -> (i32, i32) {
    %c0_i32 = arith.constant 0 : i32
    %c0_i32_0 = arith.constant 0 : i32
    return %c0_i32, %arg1 : i32, i32
  }
  func.func @transform_3(%arg0: i32, %arg1: i32) -> (i32, i32) {
    %c0_i32 = arith.constant 0 : i32
    return %arg0, %arg1 : i32, i32
  }
}

</mosaic_0001>

<llo_original>
// kernel: tpu_custom_call.1
$region0: #{tpu_custom_call.1}
  #allocation0 [shape = 'u32[]', space=smem, size = 0x4, offset = 0x4, fixed_abs, tag = 'smem constant byte address 0x4 - core index']
  #allocation1 [shape = 'u32[144,128]{1,0:T(1,128)}', space=vmem, size = 0x12000, scoped, tag = 'internal scratch']
  %s0 = inlined_call_operand.hbm [shape: bf16[512,128], index: 0, kind: input, shape index: {}]
  %s1 = inlined_call_operand.hbm [shape: bf16[128,128], index: 1, kind: input, shape index: {}]
  %s2 = inlined_call_operand.vmem [shape: f32[1,128], index: 2, kind: input, shape index: {}]
  %s3 = inlined_call_operand.hbm [shape: bf16[512,128], index: 3, kind: output, shape index: {}]
  %s4 = sld [smem:[#allocation0]]
  $region53: #{tpu_custom_call.1} parent=0
    _
  %s6 = ssub.s32 1, %s4
  %s7 = scalar_select 0, %s6, %s4
  $region1: #{tpu_custom_call.1} parent=0
    #allocation2 [shape = 'u8[131072]{0}', space=vmem, size = 0x20000, scoped, tag = 'input window, operand 0']
    #allocation3 [shape = 's32[2]{0}', space=sflag, size = 0x8, scoped, tag = 'scoped memory for tpu_custom_call.1']
    #allocation4 [shape = 's32[2]{0}', space=sflag, size = 0x8, scoped, tag = 'scoped memory for tpu_custom_call.1']
    #allocation5 [shape = 'u8[32768]{0}', space=vmem, size = 0x8000, scoped, tag = 'input window, operand 1, single buffered']
    #allocation6 [shape = 's32[1]{0}', space=sflag, size = 0x4, scoped, tag = 'scoped memory for tpu_custom_call.1']
    #allocation7 [shape = 'u8[131072]{0}', space=vmem, size = 0x20000, scoped, tag = 'output window, operand 0']
    %8 = vsyncpa [#allocation3], 0
    %s9 = scalar_lea.sflag [#allocation3], 1
    %10 = vsyncpa %s9, 0
    %11 = vsyncpa [#allocation6], 0
    %12 = vsyncpa [#allocation4], 0
    %s13 = scalar_lea.sflag [#allocation4], 1
    %14 = vsyncpa %s13, 0
    loop: start=0, step=1, limit=4
    $region2: #{tpu_custom_call.1} parent=1 // loop_pre_header
      _
    $region3: #{tpu_custom_call.1} parent=1 // loop_header
      %s16 = sphi 0, %s20
      %p17 = scmp.ge.s32.totalorder %s16, 4
      %s23 = sphi 0, %s35
      %s24 = sphi 0, %s31
      %s25 = sphi 0, %s23
      %s26 = sphi 0, %s24
      %s27 = sphi 0, %s25
      %s28 = sphi 0, %s26
      %s38 = sphi 0, %s40
      %s41 = sphi 0, %s38
      %s42 = sphi 0, %s41
      %s58 = sphi 0, %s42
      %s64 = sphi 0, %s66
      %s67 = sphi 0, %s64
      %s68 = sphi 0, %s67
      %s84 = sphi 0, %s68
      %s90 = sphi 0, %s92
      %s93 = sphi 0, %s90
      %s94 = sphi 0, %s93
      %s110 = sphi 0, %s94
      %s118 = sphi 0, %s120
      %s121 = sphi 0, %s118
      %s122 = sphi 0, %s121
      %s138 = sphi 0, %s122
    $region4: #{tpu_custom_call.1} parent=1 // loop_header_branch
      %19 = sbr.rel (%p17) target = $region8
    $region5: #{tpu_custom_call.1} parent=1 // loop_body
      %s21 = ssub.s32 %s16, 1
      %s22 = ssub.s32 %s16, 2
      %s29 = sadd.s32 1, %s24
      %p30 = scmp.ge.s32.totalorder %s29, 1
      %s31 = scalar_select %p30, 0, %s29
      %s32 = sadd.s32 1, %s23
      %s33 = scalar_select %p30, %s32, %s23
      %p34 = scmp.ge.s32.totalorder %s33, 2
      %s35 = scalar_select %p34, 0, %s33
      %s36 = ssub.s32 %s23, %s35
      %p37 = scmp.eq.s32.totalorder %s36, 0
      %s39 = sadd.s32 %s38, 1
      %s40 = scalar_select %p37, %s38, %s39
      %p43 = pneg %p37
      %p44 = scmp.eq.s32.totalorder %s16, 1
      %p45 = por %p43, %p44
      %p46 = scmp.ne.s32.totalorder %s38, %s41
      %p47 = scmp.eq.s32.totalorder %s16, 0
      %p48 = por %p46, %p47
      %p49 = scmp.ne.s32.totalorder %s38, %s41
      %p50 = scmp.eq.s32.totalorder %s21, 1
      %p51 = por %p49, %p50
      %p52 = scmp.ne.s32.totalorder %s41, %s42
      %p53 = scmp.eq.s32.totalorder %s21, 0
      %p54 = por %p52, %p53
      %p55 = scmp.ne.s32.totalorder %s41, %s42
      %p56 = scmp.eq.s32.totalorder %s22, 1
      %p57 = por %p55, %p56
      %p59 = scmp.ne.s32.totalorder %s42, %s58
      %p60 = scmp.eq.s32.totalorder %s22, 0
      %p61 = por %p59, %p60
      %s62 = ssub.s32 %s24, %s31
      %p63 = scmp.eq.s32.totalorder %s62, 0
      %s65 = sadd.s32 %s64, 1
      %s66 = scalar_select %p63, %s64, %s65
      %p69 = pneg %p63
      %p70 = scmp.eq.s32.totalorder %s16, 1
      %p71 = por %p69, %p70
      %p72 = scmp.ne.s32.totalorder %s64, %s67
      %p73 = scmp.eq.s32.totalorder %s16, 0
      %p74 = por %p72, %p73
      %p75 = scmp.ne.s32.totalorder %s64, %s67
      %p76 = scmp.eq.s32.totalorder %s21, 1
      %p77 = por %p75, %p76
      %p78 = scmp.ne.s32.totalorder %s67, %s68
      %p79 = scmp.eq.s32.totalorder %s21, 0
      %p80 = por %p78, %p79
      %p81 = scmp.ne.s32.totalorder %s67, %s68
      %p82 = scmp.eq.s32.totalorder %s22, 1
      %p83 = por %p81, %p82
      %p85 = scmp.ne.s32.totalorder %s68, %s84
      %p86 = scmp.eq.s32.totalorder %s22, 0
      %p87 = por %p85, %p86
      %s88 = ssub.s32 %s24, %s31
      %p89 = scmp.eq.s32.totalorder %s88, 0
      %s91 = sadd.s32 %s90, 1
      %s92 = scalar_select %p89, %s90, %s91
      %p95 = pneg %p89
      %p96 = scmp.eq.s32.totalorder %s16, 1
      %p97 = por %p95, %p96
      %p98 = scmp.ne.s32.totalorder %s90, %s93
      %p99 = scmp.eq.s32.totalorder %s16, 0
      %p100 = por %p98, %p99
      %p101 = scmp.ne.s32.totalorder %s90, %s93
      %p102 = scmp.eq.s32.totalorder %s21, 1
      %p103 = por %p101, %p102
      %p104 = scmp.ne.s32.totalorder %s93, %s94
      %p105 = scmp.eq.s32.totalorder %s21, 0
      %p106 = por %p104, %p105
      %p107 = scmp.ne.s32.totalorder %s93, %s94
      %p108 = scmp.eq.s32.totalorder %s22, 1
      %p109 = por %p107, %p108
      %p111 = scmp.ne.s32.totalorder %s94, %s110
      %p112 = scmp.eq.s32.totalorder %s22, 0
      %p113 = por %p111, %p112
      %s114 = ssub.s32 %s23, %s35
      %s115 = ssub.s32 %s24, %s31
      %s116 = sor.u32 %s114, %s115
      %p117 = scmp.eq.s32.totalorder %s116, 0
      %s119 = sadd.s32 %s118, 1
      %s120 = scalar_select %p117, %s118, %s119
      %p123 = pneg %p117
      %p124 = scmp.eq.s32.totalorder %s16, 1
      %p125 = por %p123, %p124
      %p126 = scmp.ne.s32.totalorder %s118, %s121
      %p127 = scmp.eq.s32.totalorder %s16, 0
      %p128 = por %p126, %p127
      %p129 = scmp.ne.s32.totalorder %s118, %s121
      %p130 = scmp.eq.s32.totalorder %s21, 1
      %p131 = por %p129, %p130
      %p132 = scmp.ne.s32.totalorder %s121, %s122
      %p133 = scmp.eq.s32.totalorder %s21, 0
      %p134 = por %p132, %p133
      %p135 = scmp.ne.s32.totalorder %s121, %s122
      %p136 = scmp.eq.s32.totalorder %s22, 1
      %p137 = por %p135, %p136
      %p139 = scmp.ne.s32.totalorder %s122, %s138
      %p140 = scmp.eq.s32.totalorder %s22, 0
      %p141 = por %p139, %p140
      %p142 = scmp.le.s32.totalorder 1, %s16
      %p143 = scmp.lt.s32.totalorder %s16, 3
      %p144 = pnand %p142, %p143
      %p145 = pneg %p144
      // Predicated region
      $region9: #{tpu_custom_call.1} parent=5 // pred_check
        _
      $region10: #{tpu_custom_call.1} parent=5 // pred_check_branch
        %147 = sbr.rel (%p144) target = $region12
      $region11: #{tpu_custom_call.1} parent=5 // pred_region
        %s148 = ssub.s32 %s16, 1
        // Predicated region
        $region13: #{tpu_custom_call.1} parent=11 // pred_check
          %p149 = pneg %p80
        $region14: #{tpu_custom_call.1} parent=11 // pred_check_branch
          %151 = sbr.rel (%p149) target = $region16
        $region15: #{tpu_custom_call.1} parent=11 // pred_region
          %s153 = ssub.s32 1024, 1024
          %154 = vsyncadd [#allocation6], %s153
          %s155 = smul.addr %s26, 64
          %s156 = scalar_lea.hbm %s1, %s155
          %s157 = sshll.u32 [#allocation5], 4
          %s158 = int_to_ptr.vmem [resolvable:$true] %s157
          %163 = dma.hbm_to_vmem [thread:$0]  %s156, 1024, %s158, [#allocation6], 64, 64, 4
        $region16: #{tpu_custom_call.1} parent=11 // pred_fallthru
          _
        // Predicated region
        $region17: #{tpu_custom_call.1} parent=11 // pred_check
          %p164 = pneg %p106
        $region18: #{tpu_custom_call.1} parent=11 // pred_check_branch
          %166 = sbr.rel (%p164) target = $region20
        $region19: #{tpu_custom_call.1} parent=11 // pred_region
          %p167 = scmp.lt.s32.totalorder %s26, 0
          %s168 = scalar_select %p167, %s26, 0
          %s169 = scalar_lea.vmem %s2, %s168
        $region20: #{tpu_custom_call.1} parent=11 // pred_fallthru
          _
      $region12: #{tpu_custom_call.1} parent=5 // pred_fallthru
        _
      %p170 = scmp.lt.s32.totalorder %s16, 2
      // Predicated region
      $region21: #{tpu_custom_call.1} parent=5 // pred_check
        %p171 = pneg %p170
      $region22: #{tpu_custom_call.1} parent=5 // pred_check_branch
        %173 = sbr.rel (%p171) target = $region24
      $region23: #{tpu_custom_call.1} parent=5 // pred_region
        // Predicated region
        $region25: #{tpu_custom_call.1} parent=23 // pred_check
          %p174 = pneg %p48
        $region26: #{tpu_custom_call.1} parent=23 // pred_check_branch
          %176 = sbr.rel (%p174) target = $region28
        $region27: #{tpu_custom_call.1} parent=23 // pred_region
          %s177 = sand.u32 %s38, 1
          %s178 = scalar_lea.sflag [#allocation3], %s177
          %s179 = sand.u32 %s38, 1
          %s180 = smul.addr %s179, 128
          %s181 = scalar_lea.vmem [#allocation2], %s180
          %s182 = smul.u32 32, %s23
          %s184 = ssub.s32 2048, 2048
          %185 = vsyncadd %s178, %s184
          %s186 = smul.addr %s182, 64
          %s187 = scalar_lea.hbm %s0, %s186
          %s188 = sshll.u32 %s181, 4
          %s189 = int_to_ptr.vmem [resolvable:$true] %s188
          %194 = dma.hbm_to_vmem [thread:$0]  %s187, 2048, %s189, %s178, 64, 64, 4
        $region28: #{tpu_custom_call.1} parent=23 // pred_fallthru
          _
      $region24: #{tpu_custom_call.1} parent=5 // pred_fallthru
        _
      %p195 = scmp.le.s32.totalorder 1, %s16
      %p196 = scmp.lt.s32.totalorder %s16, 3
      %p197 = pnand %p195, %p196
      %p198 = pneg %p197
      // Predicated region
      $region29: #{tpu_custom_call.1} parent=5 // pred_check
        _
      $region30: #{tpu_custom_call.1} parent=5 // pred_check_branch
        %200 = sbr.rel (%p197) target = $region32
      $region31: #{tpu_custom_call.1} parent=5 // pred_region
        %s201 = ssub.s32 %s16, 1
        %s202 = sand.u32 %s41, 1
        %s203 = scalar_lea.sflag [#allocation3], %s202
        %s204 = sand.u32 %s41, 1
        %s205 = smul.addr %s204, 128
        %s206 = scalar_lea.vmem [#allocation2], %s205
        // Predicated region
        $region33: #{tpu_custom_call.1} parent=31 // pred_check
          %p207 = pneg %p54
        $region34: #{tpu_custom_call.1} parent=31 // pred_check_branch
          %209 = sbr.rel (%p207) target = $region36
        $region35: #{tpu_custom_call.1} parent=31 // pred_region
          %210 = dma.done %s203, 2048
        $region36: #{tpu_custom_call.1} parent=31 // pred_fallthru
          _
        // Predicated region
        $region37: #{tpu_custom_call.1} parent=31 // pred_check
          %p211 = pneg %p80
        $region38: #{tpu_custom_call.1} parent=31 // pred_check_branch
          %213 = sbr.rel (%p211) target = $region40
        $region39: #{tpu_custom_call.1} parent=31 // pred_region
          %214 = dma.done [#allocation6], 1024
        $region40: #{tpu_custom_call.1} parent=31 // pred_fallthru
          _
        %s215 = sand.u32 %s41, 1
        %s216 = scalar_lea.sflag [#allocation3], %s215
        %s217 = sand.u32 %s41, 1
        %s218 = smul.addr %s217, 128
        %s219 = scalar_lea.vmem [#allocation2], %s218
        %p220 = pneg %p54
        %p221 = pneg %p51
        %p222 = pneg %p80
        %p223 = pneg %p77
        %p224 = scmp.lt.s32.totalorder %s26, 0
        %s225 = scalar_select %p224, %s26, 0
        %s226 = scalar_lea.vmem %s2, %s225
        %p227 = pneg %p106
        %p228 = pneg %p103
        %p229 = pneg %p134
        %p230 = pneg %p131
        %s231 = sand.u32 %s121, 1
        %s232 = scalar_lea.sflag [#allocation4], %s231
        %s233 = sand.u32 %s121, 1
        %s234 = smul.addr %s233, 128
        %s235 = scalar_lea.vmem [#allocation7], %s234
        %s236 = smul.u32 32, %s25
        %p237 = scmp.lt.s32.totalorder %s26, 0
        %s238 = scalar_select %p237, %s26, 0
        %s239 = scalar_lea.vmem %s2, %s238
        %s240 = smul.u32 32, %s25
        %v242 = vld [vmem:[%s206] sm:$0xf]
        %v243 = vld [vmem:[%s206 + $0x4] sm:$0xf]
        %v244 = vld [vmem:[%s206 + $0x8] sm:$0xf]
        %v245 = vld [vmem:[%s206 + $0xc] sm:$0xf]
        %v246 = vld [vmem:[%s206 + $0x10] sm:$0xf]
        %v247 = vld [vmem:[%s206 + $0x14] sm:$0xf]
        %v248 = vld [vmem:[%s206 + $0x18] sm:$0xf]
        %v249 = vld [vmem:[%s206 + $0x1c] sm:$0xf]
        %v250 = vld [vmem:[%s206 + $0x20] sm:$0xf]
        %v251 = vld [vmem:[%s206 + $0x24] sm:$0xf]
        %v252 = vld [vmem:[%s206 + $0x28] sm:$0xf]
        %v253 = vld [vmem:[%s206 + $0x2c] sm:$0xf]
        %v254 = vld [vmem:[%s206 + $0x30] sm:$0xf]
        %v255 = vld [vmem:[%s206 + $0x34] sm:$0xf]
        %v256 = vld [vmem:[%s206 + $0x38] sm:$0xf]
        %v257 = vld [vmem:[%s206 + $0x3c] sm:$0xf]
        %v258 = vld [vmem:[%s206 + $0x40] sm:$0xf]
        %v259 = vld [vmem:[%s206 + $0x44] sm:$0xf]
        %v260 = vld [vmem:[%s206 + $0x48] sm:$0xf]
        %v261 = vld [vmem:[%s206 + $0x4c] sm:$0xf]
        %v262 = vld [vmem:[%s206 + $0x50] sm:$0xf]
        %v263 = vld [vmem:[%s206 + $0x54] sm:$0xf]
        %v264 = vld [vmem:[%s206 + $0x58] sm:$0xf]
        %v265 = vld [vmem:[%s206 + $0x5c] sm:$0xf]
        %v266 = vld [vmem:[%s206 + $0x60] sm:$0xf]
        %v267 = vld [vmem:[%s206 + $0x64] sm:$0xf]
        %v268 = vld [vmem:[%s206 + $0x68] sm:$0xf]
        %v269 = vld [vmem:[%s206 + $0x6c] sm:$0xf]
        %v270 = vld [vmem:[%s206 + $0x70] sm:$0xf]
        %v271 = vld [vmem:[%s206 + $0x74] sm:$0xf]
        %v272 = vld [vmem:[%s206 + $0x78] sm:$0xf]
        %v273 = vld [vmem:[%s206 + $0x7c] sm:$0xf]
        %v274 = vld [vmem:[#allocation5] sm:$0xf]
        %v275 = vld [vmem:[#allocation5 + $0x4] sm:$0xf]
        %v276 = vld [vmem:[#allocation5 + $0x8] sm:$0xf]
        %v277 = vld [vmem:[#allocation5 + $0xc] sm:$0xf]
        %v278 = vld [vmem:[#allocation5 + $0x10] sm:$0xf]
        %v279 = vld [vmem:[#allocation5 + $0x14] sm:$0xf]
        %v280 = vld [vmem:[#allocation5 + $0x18] sm:$0xf]
        %v281 = vld [vmem:[#allocation5 + $0x1c] sm:$0xf]
        %v282 = vld [vmem:[#allocation5 + $0x20] sm:$0xf]
        %v283 = vld [vmem:[#allocation5 + $0x24] sm:$0xf]
        %v284 = vld [vmem:[#allocation5 + $0x28] sm:$0xf]
        %v285 = vld [vmem:[#allocation5 + $0x2c] sm:$0xf]
        %v286 = vld [vmem:[#allocation5 + $0x30] sm:$0xf]
        %v287 = vld [vmem:[#allocation5 + $0x34] sm:$0xf]
        %v288 = vld [vmem:[#allocation5 + $0x38] sm:$0xf]
        %v289 = vld [vmem:[#allocation5 + $0x3c] sm:$0xf]
        %v290 = vld [vmem:[%s239] sm:$0x1]
        %v292 = vlaneseq
        %v293 = vshrl.u32 %v292, 7
        %v294 = vsub.s32 0, %v293
        %v295 = vrot.slane %v290, %v294
        %v329 = vunpack.c.l.b16 %v242
        %v330 = vunpack.c.l.b16 %v243
        %v331 = vunpack.c.l.b16 %v244
        %v332 = vunpack.c.l.b16 %v245
        %v333 = vunpack.c.l.b16 %v246
        %v334 = vunpack.c.l.b16 %v247
        %v335 = vunpack.c.l.b16 %v248
        %v336 = vunpack.c.l.b16 %v249
        %v337 = vunpack.c.l.b16 %v250
        %v338 = vunpack.c.l.b16 %v251
        %v339 = vunpack.c.l.b16 %v252
        %v340 = vunpack.c.l.b16 %v253
        %v341 = vunpack.c.l.b16 %v254
        %v342 = vunpack.c.l.b16 %v255
        %v343 = vunpack.c.l.b16 %v256
        %v344 = vunpack.c.l.b16 %v257
        %v345 = vunpack.c.l.b16 %v258
        %v346 = vunpack.c.l.b16 %v259
        %v347 = vunpack.c.l.b16 %v260
        %v348 = vunpack.c.l.b16 %v261
        %v349 = vunpack.c.l.b16 %v262
        %v350 = vunpack.c.l.b16 %v263
        %v351 = vunpack.c.l.b16 %v264
        %v352 = vunpack.c.l.b16 %v265
        %v353 = vunpack.c.l.b16 %v266
        %v354 = vunpack.c.l.b16 %v267
        %v355 = vunpack.c.l.b16 %v268
        %v356 = vunpack.c.l.b16 %v269
        %v357 = vunpack.c.l.b16 %v270
        %v358 = vunpack.c.l.b16 %v271
        %v359 = vunpack.c.l.b16 %v272
        %v360 = vunpack.c.l.b16 %v273
        %v361 = vpack.c.b16 %v330, %v329
        %v362 = vpack.c.b16 %v332, %v331
        %v363 = vpack.c.b16 %v334, %v333
        %v364 = vpack.c.b16 %v336, %v335
        %v365 = vpack.c.b16 %v338, %v337
        %v366 = vpack.c.b16 %v340, %v339
        %v367 = vpack.c.b16 %v342, %v341
        %v368 = vpack.c.b16 %v344, %v343
        %v369 = vpack.c.b16 %v346, %v345
        %v370 = vpack.c.b16 %v348, %v347
        %v371 = vpack.c.b16 %v350, %v349
        %v372 = vpack.c.b16 %v352, %v351
        %v373 = vpack.c.b16 %v354, %v353
        %v374 = vpack.c.b16 %v356, %v355
        %v375 = vpack.c.b16 %v358, %v357
        %v376 = vpack.c.b16 %v360, %v359
        %v409 = vunpack.c.l.b16 %v274
        %v410 = vunpack.c.l.b16 %v275
        %v411 = vunpack.c.l.b16 %v276
        %v412 = vunpack.c.l.b16 %v277
        %v413 = vunpack.c.l.b16 %v278
        %v414 = vunpack.c.l.b16 %v279
        %v415 = vunpack.c.l.b16 %v280
        %v416 = vunpack.c.l.b16 %v281
        %v417 = vunpack.c.l.b16 %v282
        %v418 = vunpack.c.l.b16 %v283
        %v419 = vunpack.c.l.b16 %v284
        %v420 = vunpack.c.l.b16 %v285
        %v421 = vunpack.c.l.b16 %v286
        %v422 = vunpack.c.l.b16 %v287
        %v423 = vunpack.c.l.b16 %v288
        %v424 = vunpack.c.l.b16 %v289
        %v425 = vpack.c.b16 %v410, %v409
        %v426 = vpack.c.b16 %v412, %v411
        %v427 = vpack.c.b16 %v414, %v413
        %v428 = vpack.c.b16 %v416, %v415
        %v429 = vpack.c.b16 %v418, %v417
        %v430 = vpack.c.b16 %v420, %v419
        %v431 = vpack.c.b16 %v422, %v421
        %v432 = vpack.c.b16 %v424, %v423
        %441 = vmatprep.subr.bf16.mxu0 0
        %442 = vmatpush1.bf16.msra.mxu0 %v425
        %443 = vmatprep.subr.bf16.mxu0 0
        %444 = vmatpush1.bf16.msra.mxu0 %v426
        %445 = vmatprep.subr.bf16.mxu0 0
        %446 = vmatpush1.bf16.msra.mxu0 %v427
        %447 = vmatprep.subr.bf16.mxu0 0
        %448 = vmatpush1.bf16.msra.mxu0 %v428
        %449 = vmatprep.subr.bf16.mxu0 0
        %450 = vmatpush1.bf16.msra.mxu0 %v429
        %451 = vmatprep.subr.bf16.mxu0 0
        %452 = vmatpush1.bf16.msra.mxu0 %v430
        %453 = vmatprep.subr.bf16.mxu0 0
        %454 = vmatpush1.bf16.msra.mxu0 %v431
        %455 = vmatprep.subr.bf16.mxu0 0
        %456 = vmatpush1.bf16.msra.mxu0 %v432
        %457 = vmatprep.subr.bf16.mxu0 0
        %458 = vmatpush1.bf16.msra.mxu0 0
        %459 = vmatprep.subr.bf16.mxu0 0
        %460 = vmatpush1.bf16.msra.mxu0 0
        %461 = vmatprep.subr.bf16.mxu0 0
        %462 = vmatpush1.bf16.msra.mxu0 0
        %463 = vmatprep.subr.bf16.mxu0 0
        %464 = vmatpush1.bf16.msra.mxu0 0
        %465 = vmatprep.subr.bf16.mxu0 0
        %466 = vmatpush1.bf16.msra.mxu0 0
        %467 = vmatprep.subr.bf16.mxu0 0
        %468 = vmatpush1.bf16.msra.mxu0 0
        %469 = vmatprep.subr.bf16.mxu0 0
        %470 = vmatpush1.bf16.msra.mxu0 0
        %471 = vmatprep.subr.bf16.mxu0 0
        %472 = vmatpush1.bf16.msra.mxu0 0
        %473 = vmatprep.mubr.bf16.mxu0 0
        %474 = vmatmul.mubr.bf16.gmra.mrb[0].mxu0 %v361
        %v475 = vpop.f32.mrb[0].mxu0
        %v476 = vadd.f32 %v295, %v475
        %v477 = vpop.f32.mrb[0].mxu0
        %v478 = vpop.f32.mrb[0].mxu0
        %v479 = vadd.f32 %v295, %v478
        %v480 = vpop.f32.mrb[0].mxu0
        %481 = vmatprep.mubr.bf16.mxu0 0
        %482 = vmatmul.mubr.bf16.gmra.mrb[0].mxu0 %v362
        %v483 = vpop.f32.mrb[0].mxu0
        %v484 = vadd.f32 %v295, %v483
        %v485 = vpop.f32.mrb[0].mxu0
        %v486 = vpop.f32.mrb[0].mxu0
        %v487 = vadd.f32 %v295, %v486
        %v488 = vpop.f32.mrb[0].mxu0
        %489 = vmatprep.mubr.bf16.mxu0 0
        %490 = vmatmul.mubr.bf16.gmra.mrb[0].mxu0 %v363
        %v491 = vpop.f32.mrb[0].mxu0
        %v492 = vadd.f32 %v295, %v491
        %v493 = vpop.f32.mrb[0].mxu0
        %v494 = vpop.f32.mrb[0].mxu0
        %v495 = vadd.f32 %v295, %v494
        %v496 = vpop.f32.mrb[0].mxu0
        %497 = vmatprep.mubr.bf16.mxu0 0
        %498 = vmatmul.mubr.bf16.gmra.mrb[0].mxu0 %v364
        %v499 = vpop.f32.mrb[0].mxu0
        %v500 = vadd.f32 %v295, %v499
        %v501 = vpop.f32.mrb[0].mxu0
        %v502 = vpop.f32.mrb[0].mxu0
        %v503 = vadd.f32 %v295, %v502
        %v504 = vpop.f32.mrb[0].mxu0
        %505 = vmatprep.mubr.bf16.mxu0 0
        %506 = vmatmul.mubr.bf16.gmra.mrb[0].mxu0 %v365
        %v507 = vpop.f32.mrb[0].mxu0
        %v508 = vadd.f32 %v295, %v507
        %v509 = vpop.f32.mrb[0].mxu0
        %v510 = vpop.f32.mrb[0].mxu0
        %v511 = vadd.f32 %v295, %v510
        %v512 = vpop.f32.mrb[0].mxu0
        %513 = vmatprep.mubr.bf16.mxu0 0
        %514 = vmatmul.mubr.bf16.gmra.mrb[0].mxu0 %v366
        %v515 = vpop.f32.mrb[0].mxu0
        %v516 = vadd.f32 %v295, %v515
        %v517 = vpop.f32.mrb[0].mxu0
        %v518 = vpop.f32.mrb[0].mxu0
        %v519 = vadd.f32 %v295, %v518
        %v520 = vpop.f32.mrb[0].mxu0
        %521 = vmatprep.mubr.bf16.mxu0 0
        %522 = vmatmul.mubr.bf16.gmra.mrb[0].mxu0 %v367
        %v523 = vpop.f32.mrb[0].mxu0
        %v524 = vadd.f32 %v295, %v523
        %v525 = vpop.f32.mrb[0].mxu0
        %v526 = vpop.f32.mrb[0].mxu0
        %v527 = vadd.f32 %v295, %v526
        %v528 = vpop.f32.mrb[0].mxu0
        %529 = vmatprep.mubr.bf16.mxu0 0
        %530 = vmatmul.mubr.bf16.gmra.mrb[0].mxu0 %v368
        %v531 = vpop.f32.mrb[0].mxu0
        %v532 = vadd.f32 %v295, %v531
        %v533 = vpop.f32.mrb[0].mxu0
        %v534 = vpop.f32.mrb[0].mxu0
        %v535 = vadd.f32 %v295, %v534
        %v536 = vpop.f32.mrb[0].mxu0
        %537 = vmatprep.mubr.bf16.mxu0 0
        %538 = vmatmul.mubr.bf16.gmra.mrb[0].mxu0 %v369
        %v539 = vpop.f32.mrb[0].mxu0
        %v540 = vadd.f32 %v295, %v539
        %v541 = vpop.f32.mrb[0].mxu0
        %v542 = vpop.f32.mrb[0].mxu0
        %v543 = vadd.f32 %v295, %v542
        %v544 = vpop.f32.mrb[0].mxu0
        %545 = vmatprep.mubr.bf16.mxu0 0
        %546 = vmatmul.mubr.bf16.gmra.mrb[0].mxu0 %v370
        %v547 = vpop.f32.mrb[0].mxu0
        %v548 = vadd.f32 %v295, %v547
        %v549 = vpop.f32.mrb[0].mxu0
        %v550 = vpop.f32.mrb[0].mxu0
        %v551 = vadd.f32 %v295, %v550
        %v552 = vpop.f32.mrb[0].mxu0
        %553 = vmatprep.mubr.bf16.mxu0 0
        %554 = vmatmul.mubr.bf16.gmra.mrb[0].mxu0 %v371
        %v555 = vpop.f32.mrb[0].mxu0
        %v556 = vadd.f32 %v295, %v555
        %v557 = vpop.f32.mrb[0].mxu0
        %v558 = vpop.f32.mrb[0].mxu0
        %v559 = vadd.f32 %v295, %v558
        %v560 = vpop.f32.mrb[0].mxu0
        %561 = vmatprep.mubr.bf16.mxu0 0
        %562 = vmatmul.mubr.bf16.gmra.mrb[0].mxu0 %v372
        %v563 = vpop.f32.mrb[0].mxu0
        %v564 = vadd.f32 %v295, %v563
        %v565 = vpop.f32.mrb[0].mxu0
        %v566 = vpop.f32.mrb[0].mxu0
        %v567 = vadd.f32 %v295, %v566
        %v568 = vpop.f32.mrb[0].mxu0
        %569 = vmatprep.mubr.bf16.mxu0 0
        %570 = vmatmul.mubr.bf16.gmra.mrb[0].mxu0 %v373
        %v571 = vpop.f32.mrb[0].mxu0
        %v572 = vadd.f32 %v295, %v571
        %v573 = vpop.f32.mrb[0].mxu0
        %v574 = vpop.f32.mrb[0].mxu0
        %v575 = vadd.f32 %v295, %v574
        %v576 = vpop.f32.mrb[0].mxu0
        %577 = vmatprep.mubr.bf16.mxu0 0
        %578 = vmatmul.mubr.bf16.gmra.mrb[0].mxu0 %v374
        %v579 = vpop.f32.mrb[0].mxu0
        %v580 = vadd.f32 %v295, %v579
        %v581 = vpop.f32.mrb[0].mxu0
        %v582 = vpop.f32.mrb[0].mxu0
        %v583 = vadd.f32 %v295, %v582
        %v584 = vpop.f32.mrb[0].mxu0
        %585 = vmatprep.mubr.bf16.mxu0 0
        %586 = vmatmul.mubr.bf16.gmra.mrb[0].mxu0 %v375
        %v587 = vpop.f32.mrb[0].mxu0
        %v588 = vadd.f32 %v295, %v587
        %v589 = vpop.f32.mrb[0].mxu0
        %v590 = vpop.f32.mrb[0].mxu0
        %v591 = vadd.f32 %v295, %v590
        %v592 = vpop.f32.mrb[0].mxu0
        %593 = vmatprep.mubr.bf16.mxu0 0
        %594 = vmatmul.mubr.bf16.gmra.mrb[0].mxu0 %v376
        %v595 = vpop.f32.mrb[0].mxu0
        %v596 = vadd.f32 %v295, %v595
        %v597 = vpop.f32.mrb[0].mxu0
        %v598 = vpop.f32.mrb[0].mxu0
        %v599 = vadd.f32 %v295, %v598
        %v600 = vpop.f32.mrb[0].mxu0
        %601 = vdwg.mxu0
        %v602 = vmax.f32 %v476, 0.0
        %v603 = vmax.f32 %v479, 0.0
        %v604 = vmax.f32 %v484, 0.0
        %v605 = vmax.f32 %v487, 0.0
        %v606 = vmax.f32 %v492, 0.0
        %v607 = vmax.f32 %v495, 0.0
        %v608 = vmax.f32 %v500, 0.0
        %v609 = vmax.f32 %v503, 0.0
        %v610 = vmax.f32 %v508, 0.0
        %v611 = vmax.f32 %v511, 0.0
        %v612 = vmax.f32 %v516, 0.0
        %v613 = vmax.f32 %v519, 0.0
        %v614 = vmax.f32 %v524, 0.0
        %v615 = vmax.f32 %v527, 0.0
        %v616 = vmax.f32 %v532, 0.0
        %v617 = vmax.f32 %v535, 0.0
        %v618 = vmax.f32 %v540, 0.0
        %v619 = vmax.f32 %v543, 0.0
        %v620 = vmax.f32 %v548, 0.0
        %v621 = vmax.f32 %v551, 0.0
        %v622 = vmax.f32 %v556, 0.0
        %v623 = vmax.f32 %v559, 0.0
        %v624 = vmax.f32 %v564, 0.0
        %v625 = vmax.f32 %v567, 0.0
        %v626 = vmax.f32 %v572, 0.0
        %v627 = vmax.f32 %v575, 0.0
        %v628 = vmax.f32 %v580, 0.0
        %v629 = vmax.f32 %v583, 0.0
        %v630 = vmax.f32 %v588, 0.0
        %v631 = vmax.f32 %v591, 0.0
        %v632 = vmax.f32 %v596, 0.0
        %v633 = vmax.f32 %v599, 0.0
        %v634 = vpack.c.bf16 %v603, %v602
        %v635 = vpack.c.bf16 %v605, %v604
        %v636 = vpack.c.bf16 %v607, %v606
        %v637 = vpack.c.bf16 %v609, %v608
        %v638 = vpack.c.bf16 %v611, %v610
        %v639 = vpack.c.bf16 %v613, %v612
        %v640 = vpack.c.bf16 %v615, %v614
        %v641 = vpack.c.bf16 %v617, %v616
        %v642 = vpack.c.bf16 %v619, %v618
        %v643 = vpack.c.bf16 %v621, %v620
        %v644 = vpack.c.bf16 %v623, %v622
        %v645 = vpack.c.bf16 %v625, %v624
        %v646 = vpack.c.bf16 %v627, %v626
        %v647 = vpack.c.bf16 %v629, %v628
        %v648 = vpack.c.bf16 %v631, %v630
        %v649 = vpack.c.bf16 %v633, %v632
        %v666 = vunpack.c.l.b16 %v634
        %v667 = vunpack.c.h.b16 %v634
        %v668 = vunpack.c.l.b16 %v635
        %v669 = vunpack.c.h.b16 %v635
        %v670 = vunpack.c.l.b16 %v636
        %v671 = vunpack.c.h.b16 %v636
        %v672 = vunpack.c.l.b16 %v637
        %v673 = vunpack.c.h.b16 %v637
        %v674 = vunpack.c.l.b16 %v638
        %v675 = vunpack.c.h.b16 %v638
        %v676 = vunpack.c.l.b16 %v639
        %v677 = vunpack.c.h.b16 %v639
        %v678 = vunpack.c.l.b16 %v640
        %v679 = vunpack.c.h.b16 %v640
        %v680 = vunpack.c.l.b16 %v641
        %v681 = vunpack.c.h.b16 %v641
        %v682 = vunpack.c.l.b16 %v642
        %v683 = vunpack.c.h.b16 %v642
        %v684 = vunpack.c.l.b16 %v643
        %v685 = vunpack.c.h.b16 %v643
        %v686 = vunpack.c.l.b16 %v644
        %v687 = vunpack.c.h.b16 %v644
        %v688 = vunpack.c.l.b16 %v645
        %v689 = vunpack.c.h.b16 %v645
        %v690 = vunpack.c.l.b16 %v646
        %v691 = vunpack.c.h.b16 %v646
        %v692 = vunpack.c.l.b16 %v647
        %v693 = vunpack.c.h.b16 %v647
        %v694 = vunpack.c.l.b16 %v648
        %v695 = vunpack.c.h.b16 %v648
        %v696 = vunpack.c.l.b16 %v649
        %v697 = vunpack.c.h.b16 %v649
        %v698 = vpack.c.b16 %v666, %v666
        %v699 = vpack.c.b16 %v667, %v667
        %v700 = vpack.c.b16 %v668, %v668
        %v701 = vpack.c.b16 %v669, %v669
        %v702 = vpack.c.b16 %v670, %v670
        %v703 = vpack.c.b16 %v671, %v671
        %v704 = vpack.c.b16 %v672, %v672
        %v705 = vpack.c.b16 %v673, %v673
        %v706 = vpack.c.b16 %v674, %v674
        %v707 = vpack.c.b16 %v675, %v675
        %v708 = vpack.c.b16 %v676, %v676
        %v709 = vpack.c.b16 %v677, %v677
        %v710 = vpack.c.b16 %v678, %v678
        %v711 = vpack.c.b16 %v679, %v679
        %v712 = vpack.c.b16 %v680, %v680
        %v713 = vpack.c.b16 %v681, %v681
        %v714 = vpack.c.b16 %v682, %v682
        %v715 = vpack.c.b16 %v683, %v683
        %v716 = vpack.c.b16 %v684, %v684
        %v717 = vpack.c.b16 %v685, %v685
        %v718 = vpack.c.b16 %v686, %v686
        %v719 = vpack.c.b16 %v687, %v687
        %v720 = vpack.c.b16 %v688, %v688
        %v721 = vpack.c.b16 %v689, %v689
        %v722 = vpack.c.b16 %v690, %v690
        %v723 = vpack.c.b16 %v691, %v691
        %v724 = vpack.c.b16 %v692, %v692
        %v725 = vpack.c.b16 %v693, %v693
        %v726 = vpack.c.b16 %v694, %v694
        %v727 = vpack.c.b16 %v695, %v695
        %v728 = vpack.c.b16 %v696, %v696
        %v729 = vpack.c.b16 %v697, %v697
        %762 = vst [vmem:[%s235] sm:$0xf] %v698
        %763 = vst [vmem:[%s235 + $0x4] sm:$0xf] %v699
        %764 = vst [vmem:[%s235 + $0x8] sm:$0xf] %v700
        %765 = vst [vmem:[%s235 + $0xc] sm:$0xf] %v701
        %766 = vst [vmem:[%s235 + $0x10] sm:$0xf] %v702
        %767 = vst [vmem:[%s235 + $0x14] sm:$0xf] %v703
        %768 = vst [vmem:[%s235 + $0x18] sm:$0xf] %v704
        %769 = vst [vmem:[%s235 + $0x1c] sm:$0xf] %v705
        %770 = vst [vmem:[%s235 + $0x20] sm:$0xf] %v706
        %771 = vst [vmem:[%s235 + $0x24] sm:$0xf] %v707
        %772 = vst [vmem:[%s235 + $0x28] sm:$0xf] %v708
        %773 = vst [vmem:[%s235 + $0x2c] sm:$0xf] %v709
        %774 = vst [vmem:[%s235 + $0x30] sm:$0xf] %v710
        %775 = vst [vmem:[%s235 + $0x34] sm:$0xf] %v711
        %776 = vst [vmem:[%s235 + $0x38] sm:$0xf] %v712
        %777 = vst [vmem:[%s235 + $0x3c] sm:$0xf] %v713
        %778 = vst [vmem:[%s235 + $0x40] sm:$0xf] %v714
        %779 = vst [vmem:[%s235 + $0x44] sm:$0xf] %v715
        %780 = vst [vmem:[%s235 + $0x48] sm:$0xf] %v716
        %781 = vst [vmem:[%s235 + $0x4c] sm:$0xf] %v717
        %782 = vst [vmem:[%s235 + $0x50] sm:$0xf] %v718
        %783 = vst [vmem:[%s235 + $0x54] sm:$0xf] %v719
        %784 = vst [vmem:[%s235 + $0x58] sm:$0xf] %v720
        %785 = vst [vmem:[%s235 + $0x5c] sm:$0xf] %v721
        %786 = vst [vmem:[%s235 + $0x60] sm:$0xf] %v722
        %787 = vst [vmem:[%s235 + $0x64] sm:$0xf] %v723
        %788 = vst [vmem:[%s235 + $0x68] sm:$0xf] %v724
        %789 = vst [vmem:[%s235 + $0x6c] sm:$0xf] %v725
        %790 = vst [vmem:[%s235 + $0x70] sm:$0xf] %v726
        %791 = vst [vmem:[%s235 + $0x74] sm:$0xf] %v727
        %792 = vst [vmem:[%s235 + $0x78] sm:$0xf] %v728
        %793 = vst [vmem:[%s235 + $0x7c] sm:$0xf] %v729
        %s794 = sand.u32 %s121, 1
        %s795 = scalar_lea.sflag [#allocation4], %s794
        %s796 = sand.u32 %s121, 1
        %s797 = smul.addr %s796, 128
        %s798 = scalar_lea.vmem [#allocation7], %s797
        // Predicated region
        $region41: #{tpu_custom_call.1} parent=31 // pred_check
          %p799 = pneg %p131
        $region42: #{tpu_custom_call.1} parent=31 // pred_check_branch
          %801 = sbr.rel (%p799) target = $region44
        $region43: #{tpu_custom_call.1} parent=31 // pred_region
          %s802 = smul.u32 32, %s25
          %s804 = ssub.s32 2048, 2048
          %805 = vsyncadd %s795, %s804
          %s806 = sadd.s32 %s26, %s802
          %s807 = smul.addr %s806, 64
          %s808 = scalar_lea.hbm %s3, %s807
          %s809 = sshll.u32 %s798, 4
          %s810 = int_to_ptr.vmem [resolvable:$true] %s809
          %815 = dma.vmem_to_hbm [thread:$0]  %s810, 2048, %s808, %s795, 64, 64, 4
        $region44: #{tpu_custom_call.1} parent=31 // pred_fallthru
          _
      $region32: #{tpu_custom_call.1} parent=5 // pred_fallthru
        _
      %p816 = scmp.le.s32.totalorder 2, %s16
      // Predicated region
      $region45: #{tpu_custom_call.1} parent=5 // pred_check
        %p817 = pneg %p816
      $region46: #{tpu_custom_call.1} parent=5 // pred_check_branch
        %819 = sbr.rel (%p817) target = $region48
      $region47: #{tpu_custom_call.1} parent=5 // pred_region
        %s820 = ssub.s32 %s16, 2
        // Predicated region
        $region49: #{tpu_custom_call.1} parent=47 // pred_check
          %p821 = pneg %p137
        $region50: #{tpu_custom_call.1} parent=47 // pred_check_branch
          %823 = sbr.rel (%p821) target = $region52
        $region51: #{tpu_custom_call.1} parent=47 // pred_region
          %s824 = sand.u32 %s122, 1
          %s825 = scalar_lea.sflag [#allocation4], %s824
          %s826 = sand.u32 %s122, 1
          %s827 = smul.addr %s826, 128
          %s828 = scalar_lea.vmem [#allocation7], %s827
          %829 = dma.done %s825, 2048
        $region52: #{tpu_custom_call.1} parent=47 // pred_fallthru
          _
      $region48: #{tpu_custom_call.1} parent=5 // pred_fallthru
        _
    $region6: #{tpu_custom_call.1} parent=1 // loop_footer
      %s20 = sadd.s32 1, %s16
    $region7: #{tpu_custom_call.1} parent=1 // loop_footer_branch
      %15 = sbr.rel target = $region3
    $region8: #{tpu_custom_call.1} parent=1 // loop_exit
      _
    %830 = vsyncpa [#allocation3], 1
    %s831 = scalar_lea.sflag [#allocation3], 1
    %832 = vsyncpa %s831, 1
    %833 = vsyncpa [#allocation6], 1
    %834 = vsyncpa [#allocation4], 1
    %s835 = scalar_lea.sflag [#allocation4], 1
    %836 = vsyncpa %s835, 1

</llo_original>
